<compile_context>
chip_gen: v5e
topology: v5e:2x2
jax: 0.10.0
libtpu: 0.0.40
codegen_flags: <defaults>
</compile_context>

<pallas_src>
import math
import functools

import jax
import jax.numpy as jnp
from jax.experimental import pallas as pl
from jax.experimental.pallas import tpu as pltpu


_VMEM_LIMIT_BYTES = 64 * 1024 * 1024   # fits v7x's 64 MiB VMEM; well under v5e/v6e 128 MiB


def _cparams(*dim_sems):
    return pltpu.CompilerParams(dimension_semantics=tuple(dim_sems),
                                vmem_limit_bytes=_VMEM_LIMIT_BYTES)


def _row_block(m, target=256):
    # whole array if small, else a multiple-of-8 row tile (pl.cdiv grid handles tails)
    return m if m <= target else target


def _layer_norm(z, g, b):
    # f32 statistics, PyTorch eps=1e-5
    mu = jnp.mean(z, axis=-1, keepdims=True)
    d = z - mu
    var = jnp.mean(d * d, axis=-1, keepdims=True)
    return d * jax.lax.rsqrt(var + 1e-5) * g + b


# ----------------------------- Pallas kernels -----------------------------

def _linear_kernel(x_ref, w_ref, b_ref, o_ref):
    # bf16 MXU inputs, f32 accumulation
    x = x_ref[...].astype(jnp.bfloat16)
    y = jnp.dot(x, w_ref[...], preferred_element_type=jnp.float32) + b_ref[...]
    o_ref[...] = y.astype(o_ref.dtype)


def pallas_linear(x, w, b, out_dtype=jnp.float32):
    M, K = x.shape
    N = w.shape[1]
    tm = _row_block(M)
    return pl.pallas_call(
        _linear_kernel,
        out_shape=jax.ShapeDtypeStruct((M, N), out_dtype),
        grid=(pl.cdiv(M, tm),),
        in_specs=[
            pl.BlockSpec((tm, K), lambda i: (i, 0)),
            pl.BlockSpec((K, N), lambda i: (0, 0)),     # resident weights
            pl.BlockSpec((1, N), lambda i: (0, 0)),
        ],
        out_specs=pl.BlockSpec((tm, N), lambda i: (i, 0)),
        compiler_params=_cparams("parallel"),
    )(x, w, b.reshape(1, N))


def _proj_add_ln_kernel(x_ref, res_ref, w_ref, b_ref, g_ref, bt_ref, o_ref):
    # output projection + residual + LayerNorm1 fused (dropout = identity)
    proj = jnp.dot(x_ref[...].astype(jnp.bfloat16), w_ref[...],
                   preferred_element_type=jnp.float32) + b_ref[...]
    o_ref[...] = _layer_norm(res_ref[...] + proj, g_ref[...], bt_ref[...])


def pallas_proj_add_ln(x, res, w, b, gamma, beta):
    M, D = x.shape
    tm = _row_block(M)
    return pl.pallas_call(
        _proj_add_ln_kernel,
        out_shape=jax.ShapeDtypeStruct((M, D), jnp.float32),
        grid=(pl.cdiv(M, tm),),
        in_specs=[
            pl.BlockSpec((tm, D), lambda i: (i, 0)),
            pl.BlockSpec((tm, D), lambda i: (i, 0)),
            pl.BlockSpec((D, D), lambda i: (0, 0)),
            pl.BlockSpec((1, D), lambda i: (0, 0)),
            pl.BlockSpec((1, D), lambda i: (0, 0)),
            pl.BlockSpec((1, D), lambda i: (0, 0)),
        ],
        out_specs=pl.BlockSpec((tm, D), lambda i: (i, 0)),
        compiler_params=_cparams("parallel"),
    )(x, res, w, b.reshape(1, D), gamma.reshape(1, D), beta.reshape(1, D))


def _ffn_add_ln_kernel(x_ref, w1_ref, b1_ref, w2_ref, b2_ref, g_ref, bt_ref, o_ref):
    # FFN + residual + LayerNorm2 fused
    x = x_ref[...]
    h = jnp.dot(x.astype(jnp.bfloat16), w1_ref[...],
                preferred_element_type=jnp.float32) + b1_ref[...]
    h = jnp.maximum(h, 0.0)                               # ReLU (Deformable-DETR default)
    y = jnp.dot(h.astype(jnp.bfloat16), w2_ref[...],
                preferred_element_type=jnp.float32) + b2_ref[...]
    o_ref[...] = _layer_norm(x + y, g_ref[...], bt_ref[...])


def pallas_ffn_add_ln(x, w1, b1, w2, b2, gamma, beta):
    M, D = x.shape
    F_ = w1.shape[1]
    tm = _row_block(M)
    return pl.pallas_call(
        _ffn_add_ln_kernel,
        out_shape=jax.ShapeDtypeStruct((M, D), jnp.float32),
        grid=(pl.cdiv(M, tm),),
        in_specs=[
            pl.BlockSpec((tm, D), lambda i: (i, 0)),
            pl.BlockSpec((D, F_), lambda i: (0, 0)),
            pl.BlockSpec((1, F_), lambda i: (0, 0)),
            pl.BlockSpec((F_, D), lambda i: (0, 0)),
            pl.BlockSpec((1, D), lambda i: (0, 0)),
            pl.BlockSpec((1, D), lambda i: (0, 0)),
            pl.BlockSpec((1, D), lambda i: (0, 0)),
        ],
        out_specs=pl.BlockSpec((tm, D), lambda i: (i, 0)),
        compiler_params=_cparams("parallel"),
    )(x, w1, b1.reshape(1, F_), w2, b2.reshape(1, D),
      gamma.reshape(1, D), beta.reshape(1, D))


def _msdeform_kernel(value_ref, logits_ref, locx_ref, locy_ref, o_ref, *,
                     spatial_shapes, n_heads, n_points, head_dim):
    # value_ref : (Len, D) bf16      flattened multi-scale value map, all heads (this batch)
    # logits_ref: (Qb, H*L*P) f32    raw attention logits (softmax per head over L*P here)
    # locx/locy : (Qb, H*L*P) f32    sampling locations normalized to [0, 1]
    # o_ref     : (Qb, D) f32        lane-dense across all heads
    H, P, Dh = n_heads, n_points, head_dim
    L = len(spatial_shapes)
    LP = L * P

    logits = logits_ref[...]
    locx = locx_ref[...]
    locy = locy_ref[...]
    Qb = logits.shape[0]

    head_outs = []
    for h in range(H):
        lg = logits[:, h * LP:(h + 1) * LP]                       # (Qb, LP)
        m = jnp.max(lg, axis=-1, keepdims=True)
        e = jnp.exp(lg - m)
        attn = e * pl.reciprocal(jnp.sum(e, axis=-1, keepdims=True), approx=True)
        lx = locx[:, h * LP:(h + 1) * LP]
        ly = locy[:, h * LP:(h + 1) * LP]

        acc = jnp.zeros((Qb, Dh), jnp.float32)
        offset = 0
        for lv, (Hl, Wl) in enumerate(spatial_shapes):
            Len_l = Hl * Wl
            sl = slice(lv * P, (lv + 1) * P)
            xs = lx[:, sl] * Wl - 0.5            # pixel coords, align_corners=False
            ys = ly[:, sl] * Hl - 0.5
            w = attn[:, sl]                      # (Qb, P)
            x0 = jnp.floor(xs)
            y0 = jnp.floor(ys)
            fx = xs - x0
            fy = ys - y0
            x0i = x0.astype(jnp.int32)
            y0i = y0.astype(jnp.int32)

            # iota over this level's own spatial extent, hoisted out of the tap loop
            iota_l = jax.lax.broadcasted_iota(jnp.int32, (1, Len_l), 1)

            # A[q, s] = sum of (attn * bilinear) weights of taps that hit cell s of
            # this level; out_level = A @ value_level reproduces
            # F.grid_sample(bilinear, align_corners=False, padding_mode='zeros').
            A = jnp.zeros((Qb, Len_l), jnp.float32)
            for dx, dy in ((0, 0), (1, 0), (0, 1), (1, 1)):
                xi = x0i + dx
                yi = y0i + dy
                cw = (fx if dx else (1.0 - fx)) * (fy if dy else (1.0 - fy))
                valid = (xi >= 0) & (xi < Wl) & (yi >= 0) & (yi < Hl)
                contrib = w * cw * valid.astype(jnp.float32)      # (Qb, P)
                s = yi * Wl + xi                                  # (Qb, P) flat index
                for pt in range(P):
                    hit = s[:, pt:pt + 1] == iota_l               # (Qb, Len_l)
                    A = A + jnp.where(hit, contrib[:, pt:pt + 1], 0.0)

            v_l = value_ref[offset:offset + Len_l, h * Dh:(h + 1) * Dh]   # (Len_l, Dh) bf16
            acc = acc + jnp.dot(A.astype(jnp.bfloat16), v_l,
                                preferred_element_type=jnp.float32)
            offset += Len_l
        head_outs.append(acc)

    o_ref[...] = jnp.concatenate(head_outs, axis=-1)              # lane-dense (Qb, D)


def pallas_msdeform_core(value, logits, locx, locy, spatial_shapes,
                         n_heads, n_points, q_block=512):
    # value (N, Len, D) bf16; logits/locx/locy (N, Q, H*L*P) f32 -> out (N, Q, D) f32
    N, Len, D = value.shape
    Q = logits.shape[1]
    HLP = logits.shape[2]
    Dh = D // n_heads
    qb = Q if Q <= q_block else q_block
    kernel = functools.partial(
        _msdeform_kernel, spatial_shapes=tuple(spatial_shapes),
        n_heads=n_heads, n_points=n_points, head_dim=Dh)
    return pl.pallas_call(
        kernel,
        out_shape=jax.ShapeDtypeStruct((N, Q, D), jnp.float32),
        grid=(N, pl.cdiv(Q, qb)),
        in_specs=[
            pl.BlockSpec((None, Len, D), lambda b, q: (b, 0, 0)),   # value resident per batch
            pl.BlockSpec((None, qb, HLP), lambda b, q: (b, q, 0)),
            pl.BlockSpec((None, qb, HLP), lambda b, q: (b, q, 0)),
            pl.BlockSpec((None, qb, HLP), lambda b, q: (b, q, 0)),
        ],
        out_specs=pl.BlockSpec((None, qb, D), lambda b, q: (b, q, 0)),
        compiler_params=_cparams("parallel", "parallel"),
    )(value, logits, locx, locy)


# ----------------------------- Plain-JAX glue -----------------------------

def get_reference_points(spatial_shapes, valid_ratios):
    # Mirrors DeformableTransformerEncoder.get_reference_points
    ref_list = []
    for lvl, (H_, W_) in enumerate(spatial_shapes):
        ref_y, ref_x = jnp.meshgrid(
            jnp.linspace(0.5, H_ - 0.5, H_, dtype=jnp.float32),
            jnp.linspace(0.5, W_ - 0.5, W_, dtype=jnp.float32),
            indexing="ij")
        ref_y = ref_y.reshape(-1)[None] / (valid_ratios[:, None, lvl, 1] * H_)
        ref_x = ref_x.reshape(-1)[None] / (valid_ratios[:, None, lvl, 0] * W_)
        ref_list.append(jnp.stack((ref_x, ref_y), -1))
    reference_points = jnp.concatenate(ref_list, 1)                          # (N, Len, 2)
    reference_points = reference_points[:, :, None] * valid_ratios[:, None]  # (N, Len, L, 2)
    return reference_points


def encoder_layer_forward(p, src, pos, reference_points, spatial_shapes,
                          n_heads, n_points):
    N, Len, D = src.shape
    L = len(spatial_shapes)
    P = n_points
    H = n_heads
    M = N * Len

    src_flat = src.reshape(M, D)
    q_flat = (src + pos).reshape(M, D)

    # MSDeformAttn value projection; bf16 output halves HBM traffic of the big tensor.
    value = pallas_linear(src_flat, p["Wv"], p["bv"],
                          out_dtype=jnp.bfloat16).reshape(N, Len, D)

    # Fused sampling-offset + attention-weight projection (one matmul over q_flat).
    oa = pallas_linear(q_flat, p["Woa"], p["boa"])               # (M, H*L*P*3)
    n_off = H * L * P * 2
    offsets = oa[:, :n_off].reshape(N, Len, H, L, P, 2)
    logits = oa[:, n_off:].reshape(N, Len, H * L * P)            # natural (N, Q, H*L*P)

    # sampling_locations = ref + offset / [W, H]   (normalized to [0, 1])
    normalizer = jnp.array([[w_, h_] for (h_, w_) in spatial_shapes], jnp.float32)
    loc = (reference_points[:, :, None, :, None, :]
           + offsets / normalizer[None, None, None, :, None, :])  # (N, Q, H, L, P, 2)
    locx = loc[..., 0].reshape(N, Len, H * L * P)
    locy = loc[..., 1].reshape(N, Len, H * L * P)

    core = pallas_msdeform_core(value, logits, locx, locy, spatial_shapes, H, P)

    # output projection + residual + LayerNorm1 (fused; dropout = identity)
    x = pallas_proj_add_ln(core.reshape(M, D), src_flat, p["Wp"], p["bp"],
                           p["g1"], p["bt1"])

    # FFN + residual + LayerNorm2 (fused)
    x = pallas_ffn_add_ln(x, p["W1"], p["bb1"], p["W2"], p["bb2"], p["g2"], p["bt2"])
    return x.reshape(N, Len, D)


def encoder_forward(layer_params_list, src, spatial_shapes, level_start_index,
                    valid_ratios, pos, n_heads, n_points):
    # level_start_index carried for API parity with the PyTorch module (unused:
    # level offsets are recomputed statically inside the deformable core kernel).
    del level_start_index
    reference_points = get_reference_points(spatial_shapes, valid_ratios)
    out = src
    for p in layer_params_list:
        out = encoder_layer_forward(p, out, pos, reference_points, spatial_shapes,
                                    n_heads, n_points)
    return out


def init_layer_params(key, d_model, n_heads, n_levels, n_points, d_ffn):
    ks = jax.random.split(key, 6)

    def dense(k, din, dout, wscale=None, bscale=0.02):
        kw, kb = jax.random.split(k)
        if wscale is None:
            wscale = 1.0 / math.sqrt(din)
        w = jax.random.normal(kw, (din, dout), jnp.float32) * wscale
        b = jax.random.normal(kb, (dout,), jnp.float32) * bscale
        return w, b

    Wv, bv = dense(ks[0], d_model, d_model)
    # small offset weights so sampling stays near the reference points
    Wo, bo = dense(ks[1], d_model, n_heads * n_levels * n_points * 2,
                   wscale=0.02, bscale=0.2)
    Wa, ba = dense(ks[2], d_model, n_heads * n_levels * n_points)
    Wp, bp = dense(ks[3], d_model, d_model)
    W1, bb1 = dense(ks[4], d_model, d_ffn)
    W2, bb2 = dense(ks[5], d_ffn, d_model)

    # fuse offset + attention projections (both consume src+pos) into one matmul
    Woa = jnp.concatenate([Wo, Wa], axis=1)
    boa = jnp.concatenate([bo, ba], axis=0)

    bf = lambda w: w.astype(jnp.bfloat16)   # bf16 MXU weights; biases/LN stay f32
    ones = jnp.ones((d_model,), jnp.float32)
    zeros = jnp.zeros((d_model,), jnp.float32)
    return dict(Wv=bf(Wv), bv=bv, Woa=bf(Woa), boa=boa, Wp=bf(Wp), bp=bp,
                g1=ones, bt1=zeros, W1=bf(W1), bb1=bb1, W2=bf(W2), bb2=bb2,
                g2=ones, bt2=zeros)


if __name__ == "__main__":
    # Small, module-consistent configuration.
    d_model, n_heads, n_levels, n_points, d_ffn, num_layers = 32, 4, 2, 4, 64, 2
    spatial_shapes = ((8, 8), (4, 4))        # multi-scale feature-map sizes (H, W)
    batch = 2
    seq_len = sum(h * w for h, w in spatial_shapes)   # 80 flattened tokens

    key = jax.random.PRNGKey(0)
    k_src, k_pos, k_vr, k_par = jax.random.split(key, 4)
    src = jax.random.normal(k_src, (batch, seq_len, d_model), jnp.float32)
    pos = jax.random.normal(k_pos, (batch, seq_len, d_model), jnp.float32) * 0.1
    valid_ratios = jax.random.uniform(k_vr, (batch, n_levels, 2), jnp.float32,
                                      minval=0.8, maxval=1.0)
    level_start_index = jnp.array([0, spatial_shapes[0][0] * spatial_shapes[0][1]],
                                  jnp.int32)

    # _get_clones deep-copies the encoder layer, so all layers start with identical params.
    layer_params = init_layer_params(k_par, d_model, n_heads, n_levels, n_points, d_ffn)
    params = [layer_params] * num_layers

    out = encoder_forward(params, src, spatial_shapes, level_start_index,
                          valid_ratios, pos, n_heads=n_heads, n_points=n_points)
    out = jax.block_until_ready(out)
    assert out.shape == (batch, seq_len, d_model)
    assert bool(jnp.all(jnp.isfinite(out)))
    print("KERNEL_OK")
</pallas_src>

<mosaic_0001>
module attributes {stable_mosaic.version = 11 : i64} {
  func.func @_linear_kernel(%arg0: i32, %arg1: memref<160x32xf32, #tpu.memory_space<vmem>>, %arg2: memref<32x32xbf16, #tpu.memory_space<vmem>>, %arg3: memref<1x32xf32, #tpu.memory_space<vmem>>, %arg4: memref<160x32xbf16, #tpu.memory_space<vmem>>) attributes {dimension_semantics = [#tpu.dimension_semantics<parallel>], iteration_bounds = array<i64: 1>, scalar_prefetch = 0 : i64, scratch_operands = 0 : i64, tpu.core_type = #tpu.core_type<tc>, window_params = [{transform_indices = @transform_0, window_bounds = array<i64: 160, 32>}, {pipeline_mode = #tpu.pipeline_mode<synchronous>, transform_indices = @transform_1, window_bounds = array<i64: 32, 32>}, {pipeline_mode = #tpu.pipeline_mode<synchronous>, transform_indices = @transform_2, window_bounds = array<i64: 1, 32>}, {transform_indices = @transform_3, window_bounds = array<i64: 160, 32>}]} {
    %c0 = arith.constant 0 : index
    %c0_0 = arith.constant 0 : index
    %0 = vector.load %arg1[%c0, %c0_0] : memref<160x32xf32, #tpu.memory_space<vmem>>, vector<160x32xf32>
    %1 = arith.truncf %0 : vector<160x32xf32> to vector<160x32xbf16>
    %c0_1 = arith.constant 0 : index
    %c0_2 = arith.constant 0 : index
    %2 = vector.load %arg2[%c0_1, %c0_2] : memref<32x32xbf16, #tpu.memory_space<vmem>>, vector<32x32xbf16>
    %cst = arith.constant dense<0.000000e+00> : vector<160x32xf32>
    %3 = tpu.matmul %1, %2, %cst {dimension_numbers = #tpu.dot_dimension_numbers<[1], [0], [0], [1], [0, 0, 1, 1], [], []>} : vector<160x32xbf16>, vector<32x32xbf16>, vector<160x32xf32> -> vector<160x32xf32>
    %c0_3 = arith.constant 0 : index
    %c0_4 = arith.constant 0 : index
    %4 = vector.load %arg3[%c0_3, %c0_4] : memref<1x32xf32, #tpu.memory_space<vmem>>, vector<1x32xf32>
    %5 = vector.broadcast %4 : vector<1x32xf32> to vector<160x32xf32>
    %6 = arith.addf %3, %5 : vector<160x32xf32>
    %7 = arith.truncf %6 : vector<160x32xf32> to vector<160x32xbf16>
    %c0_5 = arith.constant 0 : index
    %c0_6 = arith.constant 0 : index
    %8 = vector.load %arg4[%c0_5, %c0_6] : memref<160x32xbf16, #tpu.memory_space<vmem>>, vector<160x32xbf16>
    tpu.vector_store %arg4[%c0_5, %c0_6], %7 {strides = array<i32>} : memref<160x32xbf16, #tpu.memory_space<vmem>>, vector<160x32xbf16>,
    return
  }
  func.func @transform_0(%arg0: i32) -> (i32, i32) {
    %c0_i32 = arith.constant 0 : i32
    %c0_i32_0 = arith.constant 0 : i32
    return %arg0, %c0_i32 : i32, i32
  }
  func.func @transform_1(%arg0: i32) -> (i32, i32) {
    %c0_i32 = arith.constant 0 : i32
    %c0_i32_0 = arith.constant 0 : i32
    %c0_i32_1 = arith.constant 0 : i32
    return %c0_i32, %c0_i32_0 : i32, i32
  }
  func.func @transform_2(%arg0: i32) -> (i32, i32) {
    %c0_i32 = arith.constant 0 : i32
    %c0_i32_0 = arith.constant 0 : i32
    %c0_i32_1 = arith.constant 0 : i32
    return %c0_i32, %c0_i32_0 : i32, i32
  }
  func.func @transform_3(%arg0: i32) -> (i32, i32) {
    %c0_i32 = arith.constant 0 : i32
    %c0_i32_0 = arith.constant 0 : i32
    return %arg0, %c0_i32 : i32, i32
  }
}

</mosaic_0001>

<llo_original>
// kernel: tpu_custom_call.1
$region0: #{tpu_custom_call.1}
  #allocation0 [shape = 'u32[]', space=smem, size = 0x4, offset = 0x4, fixed_abs, tag = 'smem constant byte address 0x4 - core index']
  #allocation1 [shape = 'u32[72,128]{1,0:T(1,128)}', space=vmem, size = 0x9000, scoped, tag = 'internal scratch']
  %s0 = inlined_call_operand.vmem [shape: f32[160,32], index: 0, kind: input, shape index: {}]
  %s1 = inlined_call_operand.vmem [shape: bf16[32,32], index: 1, kind: input, shape index: {}]
  %s2 = inlined_call_operand.vmem [shape: f32[1,32], index: 2, kind: input, shape index: {}]
  %s3 = inlined_call_operand.vmem [shape: bf16[160,32], index: 3, kind: output, shape index: {}]
  %s4 = sld [smem:[#allocation0]]
  $region22: #{tpu_custom_call.1} parent=0
    _
  %s6 = ssub.s32 1, %s4
  %s7 = scalar_select 0, %s6, %s4
  // Predicated region
  $region2: #{tpu_custom_call.1} parent=0 // pred_check
    _
  $region3: #{tpu_custom_call.1} parent=0 // pred_check_branch
    %9 = sbr.rel (0) target = $region5
  $region4: #{tpu_custom_call.1} parent=0 // pred_region
    _
  $region5: #{tpu_custom_call.1} parent=0 // pred_fallthru
    _
  // Predicated region
  $region6: #{tpu_custom_call.1} parent=0 // pred_check
    _
  $region7: #{tpu_custom_call.1} parent=0 // pred_check_branch
    %11 = sbr.rel (0) target = $region9
  $region8: #{tpu_custom_call.1} parent=0 // pred_region
    _
  $region9: #{tpu_custom_call.1} parent=0 // pred_fallthru
    _
  // Predicated region
  $region10: #{tpu_custom_call.1} parent=0 // pred_check
    _
  $region11: #{tpu_custom_call.1} parent=0 // pred_check_branch
    %13 = sbr.rel (0) target = $region13
  $region12: #{tpu_custom_call.1} parent=0 // pred_region
    _
  $region13: #{tpu_custom_call.1} parent=0 // pred_fallthru
    _
  %v15 = vld [vmem:[%s0] sm:$0xff]
  %v16 = vld [vmem:[%s0 + $0x8] sm:$0xff]
  %v17 = vld [vmem:[%s0 + $0x10] sm:$0xff]
  %v18 = vld [vmem:[%s0 + $0x18] sm:$0xff]
  %v19 = vld [vmem:[%s0 + $0x20] sm:$0xff]
  %v20 = vld [vmem:[%s0 + $0x28] sm:$0xff]
  %v21 = vld [vmem:[%s0 + $0x30] sm:$0xff]
  %v22 = vld [vmem:[%s0 + $0x38] sm:$0xff]
  %v23 = vld [vmem:[%s0 + $0x40] sm:$0xff]
  %v24 = vld [vmem:[%s0 + $0x48] sm:$0xff]
  %v25 = vld [vmem:[%s0 + $0x50] sm:$0xff]
  %v26 = vld [vmem:[%s0 + $0x58] sm:$0xff]
  %v27 = vld [vmem:[%s0 + $0x60] sm:$0xff]
  %v28 = vld [vmem:[%s0 + $0x68] sm:$0xff]
  %v29 = vld [vmem:[%s0 + $0x70] sm:$0xff]
  %v30 = vld [vmem:[%s0 + $0x78] sm:$0xff]
  %v31 = vld [vmem:[%s0 + $0x80] sm:$0xff]
  %v32 = vld [vmem:[%s0 + $0x88] sm:$0xff]
  %v33 = vld [vmem:[%s0 + $0x90] sm:$0xff]
  %v34 = vld [vmem:[%s0 + $0x98] sm:$0xff]
  %v35 = vpack.c.bf16 %v16, %v15
  %v36 = vpack.c.bf16 %v18, %v17
  %v37 = vpack.c.bf16 %v20, %v19
  %v38 = vpack.c.bf16 %v22, %v21
  %v39 = vpack.c.bf16 %v24, %v23
  %v40 = vpack.c.bf16 %v26, %v25
  %v41 = vpack.c.bf16 %v28, %v27
  %v42 = vpack.c.bf16 %v30, %v29
  %v43 = vpack.c.bf16 %v32, %v31
  %v44 = vpack.c.bf16 %v34, %v33
  %v45 = vld [vmem:[%s1] sm:$0xf]
  %v46 = vld [vmem:[%s1 + $0x4] sm:$0xf]
  %v47 = vld [vmem:[%s1 + $0x8] sm:$0xf]
  %v48 = vld [vmem:[%s1 + $0xc] sm:$0xf]
  %v49 = vld [vmem:[%s2] sm:$0x1]
  %v51 = vperm.slane %v49, 0
  %v57 = vunpack.c.l.b16 %v45
  %v58 = vunpack.c.l.b16 %v46
  %v59 = vunpack.c.l.b16 %v47
  %v60 = vunpack.c.l.b16 %v48
  %v61 = vpack.c.b16 %v58, %v57
  %v62 = vpack.c.b16 %v60, %v59
  %vm65 = vcmask 261120
  %v67 = vsel %vm65, %v35, 0
  %v70 = vsel %vm65, %v36, 0
  %v73 = vsel %vm65, %v37, 0
  %v76 = vsel %vm65, %v38, 0
  %v79 = vsel %vm65, %v39, 0
  %v82 = vsel %vm65, %v40, 0
  %v85 = vsel %vm65, %v41, 0
  %v88 = vsel %vm65, %v42, 0
  %v91 = vsel %vm65, %v43, 0
  %v94 = vsel %vm65, %v44, 0
  %96 = vmatpush.bf16.msra.mxu0 0
  %97 = vmatpush.bf16.msra.mxu0 0
  %98 = vmatpush.bf16.msra.mxu0 0
  %99 = vmatpush.bf16.msra.mxu0 0
  %100 = vmatpush.bf16.msra.mxu0 0
  %101 = vmatpush.bf16.msra.mxu0 0
  %102 = vmatpush.bf16.msra.mxu0 %v62
  %103 = vmatpush.bf16.msra.mxu0 %v61
  %104 = vmatmul.bf16.gmra.mxu0 %v67
  %v105 = vpop.f32.mrf.mxu0
  %v106 = vadd.f32 %v51, %v105
  %v107 = vpop.f32.mrf.mxu0
  %v108 = vadd.f32 %v51, %v107
  %109 = vmatmul.bf16.gmra.mxu0 %v70
  %v110 = vpop.f32.mrf.mxu0
  %v111 = vadd.f32 %v51, %v110
  %v112 = vpop.f32.mrf.mxu0
  %v113 = vadd.f32 %v51, %v112
  %114 = vmatmul.bf16.gmra.mxu0 %v73
  %v115 = vpop.f32.mrf.mxu0
  %v116 = vadd.f32 %v51, %v115
  %v117 = vpop.f32.mrf.mxu0
  %v118 = vadd.f32 %v51, %v117
  %119 = vmatmul.bf16.gmra.mxu0 %v76
  %v120 = vpop.f32.mrf.mxu0
  %v121 = vadd.f32 %v51, %v120
  %v122 = vpop.f32.mrf.mxu0
  %v123 = vadd.f32 %v51, %v122
  %124 = vmatmul.bf16.gmra.mxu0 %v79
  %v125 = vpop.f32.mrf.mxu0
  %v126 = vadd.f32 %v51, %v125
  %v127 = vpop.f32.mrf.mxu0
  %v128 = vadd.f32 %v51, %v127
  %129 = vmatmul.bf16.gmra.mxu0 %v82
  %v130 = vpop.f32.mrf.mxu0
  %v131 = vadd.f32 %v51, %v130
  %v132 = vpop.f32.mrf.mxu0
  %v133 = vadd.f32 %v51, %v132
  %134 = vmatmul.bf16.gmra.mxu0 %v85
  %v135 = vpop.f32.mrf.mxu0
  %v136 = vadd.f32 %v51, %v135
  %v137 = vpop.f32.mrf.mxu0
  %v138 = vadd.f32 %v51, %v137
  %139 = vmatmul.bf16.gmra.mxu0 %v88
  %v140 = vpop.f32.mrf.mxu0
  %v141 = vadd.f32 %v51, %v140
  %v142 = vpop.f32.mrf.mxu0
  %v143 = vadd.f32 %v51, %v142
  %144 = vmatmul.bf16.gmra.mxu0 %v91
  %v145 = vpop.f32.mrf.mxu0
  %v146 = vadd.f32 %v51, %v145
  %v147 = vpop.f32.mrf.mxu0
  %v148 = vadd.f32 %v51, %v147
  %149 = vmatmul.bf16.gmra.mxu0 %v94
  %v150 = vpop.f32.mrf.mxu0
  %v151 = vadd.f32 %v51, %v150
  %v152 = vpop.f32.mrf.mxu0
  %v153 = vadd.f32 %v51, %v152
  %154 = vdwg.mxu0
  %v155 = vpack.c.bf16 %v106, %v106
  %v156 = vpack.c.bf16 %v108, %v108
  %v157 = vpack.c.bf16 %v111, %v111
  %v158 = vpack.c.bf16 %v113, %v113
  %v159 = vpack.c.bf16 %v116, %v116
  %v160 = vpack.c.bf16 %v118, %v118
  %v161 = vpack.c.bf16 %v121, %v121
  %v162 = vpack.c.bf16 %v123, %v123
  %v163 = vpack.c.bf16 %v126, %v126
  %v164 = vpack.c.bf16 %v128, %v128
  %v165 = vpack.c.bf16 %v131, %v131
  %v166 = vpack.c.bf16 %v133, %v133
  %v167 = vpack.c.bf16 %v136, %v136
  %v168 = vpack.c.bf16 %v138, %v138
  %v169 = vpack.c.bf16 %v141, %v141
  %v170 = vpack.c.bf16 %v143, %v143
  %v171 = vpack.c.bf16 %v146, %v146
  %v172 = vpack.c.bf16 %v148, %v148
  %v173 = vpack.c.bf16 %v151, %v151
  %v174 = vpack.c.bf16 %v153, %v153
  %vm175 = vcmask 257024
  %176 = vst.msk [vmem:[%s3] sm:$0xf] %vm175, %v155
  %177 = vst.msk [vmem:[%s3 + $0x4] sm:$0xf] %vm175, %v156
  %178 = vst.msk [vmem:[%s3 + $0x8] sm:$0xf] %vm175, %v157
  %179 = vst.msk [vmem:[%s3 + $0xc] sm:$0xf] %vm175, %v158
  %180 = vst.msk [vmem:[%s3 + $0x10] sm:$0xf] %vm175, %v159
  %181 = vst.msk [vmem:[%s3 + $0x14] sm:$0xf] %vm175, %v160
  %182 = vst.msk [vmem:[%s3 + $0x18] sm:$0xf] %vm175, %v161
  %183 = vst.msk [vmem:[%s3 + $0x1c] sm:$0xf] %vm175, %v162
  %184 = vst.msk [vmem:[%s3 + $0x20] sm:$0xf] %vm175, %v163
  %185 = vst.msk [vmem:[%s3 + $0x24] sm:$0xf] %vm175, %v164
  %186 = vst.msk [vmem:[%s3 + $0x28] sm:$0xf] %vm175, %v165
  %187 = vst.msk [vmem:[%s3 + $0x2c] sm:$0xf] %vm175, %v166
  %188 = vst.msk [vmem:[%s3 + $0x30] sm:$0xf] %vm175, %v167
  %189 = vst.msk [vmem:[%s3 + $0x34] sm:$0xf] %vm175, %v168
  %190 = vst.msk [vmem:[%s3 + $0x38] sm:$0xf] %vm175, %v169
  %191 = vst.msk [vmem:[%s3 + $0x3c] sm:$0xf] %vm175, %v170
  %192 = vst.msk [vmem:[%s3 + $0x40] sm:$0xf] %vm175, %v171
  %193 = vst.msk [vmem:[%s3 + $0x44] sm:$0xf] %vm175, %v172
  %194 = vst.msk [vmem:[%s3 + $0x48] sm:$0xf] %vm175, %v173
  %195 = vst.msk [vmem:[%s3 + $0x4c] sm:$0xf] %vm175, %v174
  // Predicated region
  $region14: #{tpu_custom_call.1} parent=0 // pred_check
    _
  $region15: #{tpu_custom_call.1} parent=0 // pred_check_branch
    %197 = sbr.rel (0) target = $region17
  $region16: #{tpu_custom_call.1} parent=0 // pred_region
    _
  $region17: #{tpu_custom_call.1} parent=0 // pred_fallthru
    _
  // Predicated region
  $region18: #{tpu_custom_call.1} parent=0 // pred_check
    _
  $region19: #{tpu_custom_call.1} parent=0 // pred_check_branch
    %199 = sbr.rel (0) target = $region21
  $region20: #{tpu_custom_call.1} parent=0 // pred_region
    _
  $region21: #{tpu_custom_call.1} parent=0 // pred_fallthru
    _

</llo_original>
